<compile_context>
chip_gen: v5e
topology: v5e:2x2
jax: 0.10.0
libtpu: 0.0.40
codegen_flags: <defaults>
</compile_context>

<pallas_src>
import functools

import jax
import jax.numpy as jnp
from jax import lax
from jax.experimental import pallas as pl
from jax.experimental.pallas import tpu as pltpu


def _attention_kernel(x_ref, wqkv_ref, wout_ref, bout_ref, o_ref, *, heads, scale):
    """o = to_out( softmax(q k^T * scale) v )  for one batch element."""
    x = x_ref[0]                                  # [N, D]
    n, d = x.shape
    dh = d // heads

    # Fused QKV projection: one MXU matmul with a lane-dense 3*D-wide output.
    qkv = jnp.dot(x, wqkv_ref[...], preferred_element_type=jnp.float32)  # [N, 3D]
    q = qkv[:, 0:d]
    k = qkv[:, d:2 * d]
    v = qkv[:, 2 * d:3 * d]

    # Per-head attention.  `heads` is small and static, so a Python loop over
    # contiguous lane slices avoids any in-kernel head-dim relayout.
    head_outs = []
    for h in range(heads):
        lo = h * dh
        q_h = q[:, lo:lo + dh]                    # [N, dh]
        k_h = k[:, lo:lo + dh]
        v_h = v[:, lo:lo + dh]
        # q_h @ k_h^T : contract the head dim of both operands (no transpose op).
        dots = lax.dot_general(q_h, k_h, (((1,), (1,)), ((), ())),
                               preferred_element_type=jnp.float32) * scale  # [N, N]
        dots = dots - jnp.max(dots, axis=-1, keepdims=True)
        p = jnp.exp(dots)
        attn = p / jnp.sum(p, axis=-1, keepdims=True)
        head_outs.append(jnp.dot(attn, v_h, preferred_element_type=jnp.float32))

    # rearrange 'b h n d -> b n (h d)'  ==  concat per-head outputs along lanes.
    out_heads = jnp.concatenate(head_outs, axis=-1)        # [N, D]

    out = jnp.dot(out_heads.astype(wout_ref.dtype), wout_ref[...],
                  preferred_element_type=jnp.float32)
    out = out + bout_ref[...]                              # (1, D) broadcast, hoisted
    o_ref[0] = out.astype(o_ref.dtype)


def attention(x, w_qkv, w_out, b_out, *, heads=8):
    """x: [B, N, D];  w_qkv: [D, 3D];  w_out: [D, D];  b_out: [D]."""
    B, N, D = x.shape
    assert D % heads == 0, "dim must be divisible by heads"
    assert w_qkv.shape == (D, 3 * D) and w_out.shape == (D, D) and b_out.shape == (D,)
    scale = float(D) ** -0.5          # PyTorch module uses dim**-0.5 (not head_dim)

    b_out2d = b_out.reshape(1, D)
    itemsize = jnp.dtype(x.dtype).itemsize

    # Cost hint so XLA schedules neighbouring ops around the custom call.
    flops = B * (2 * N * D * 3 * D        # qkv projection
                 + 2 * N * N * D          # q @ k^T over all heads
                 + 2 * N * N * D          # attn @ v over all heads
                 + 2 * N * D * D)         # output projection
    transcendentals = B * heads * N * N   # softmax exp
    bytes_accessed = int((2 * B * N * D) * itemsize
                         + (w_qkv.size + w_out.size + b_out.size) * itemsize)

    # Explicit VMEM budget: double-buffered x/out blocks + resident (also
    # double-buffered) weights + f32 intermediates.  Keep well under v7x's
    # 64 MiB per-TensorCore VMEM.
    vmem_needed = (
        2 * 2 * N * D * itemsize                       # x + out blocks, 2-deep
        + 2 * (D * 3 * D + D * D + D) * itemsize       # weights/bias, 2-deep
        + (N * 3 * D + heads * N * N + 2 * N * D) * 4  # f32 intermediates (rough)
    )
    vmem_limit = int(min(max(2 * vmem_needed, 32 * 1024 * 1024),
                         56 * 1024 * 1024))

    kernel = functools.partial(_attention_kernel, heads=heads, scale=scale)

    return pl.pallas_call(
        kernel,
        out_shape=jax.ShapeDtypeStruct((B, N, D), x.dtype),
        grid_spec=pltpu.PrefetchScalarGridSpec(
            num_scalar_prefetch=0,
            grid=(B,),
            in_specs=[
                pl.BlockSpec((1, N, D), lambda b: (b, 0, 0)),   # x rows (per batch)
                pl.BlockSpec((D, 3 * D), lambda b: (0, 0)),     # W_qkv (resident)
                pl.BlockSpec((D, D), lambda b: (0, 0)),         # W_out (resident)
                pl.BlockSpec((1, D), lambda b: (0, 0)),         # b_out (resident)
            ],
            out_specs=pl.BlockSpec((1, N, D), lambda b: (b, 0, 0)),
        ),
        compiler_params=pltpu.CompilerParams(
            dimension_semantics=("parallel",),
            vmem_limit_bytes=vmem_limit),
        cost_estimate=pl.CostEstimate(flops=flops,
                                      transcendentals=transcendentals,
                                      bytes_accessed=bytes_accessed),
    )(x, w_qkv, w_out, b_out2d)


def _reference(x, w_qkv, w_out, b_out, heads):
    B, N, D = x.shape
    dh = D // heads
    scale = float(D) ** -0.5
    qkv = jnp.einsum("bnd,de->bne", x, w_qkv).reshape(B, N, 3, heads, dh)
    q = jnp.transpose(qkv[:, :, 0], (0, 2, 1, 3))   # [B, H, N, dh]
    k = jnp.transpose(qkv[:, :, 1], (0, 2, 1, 3))
    v = jnp.transpose(qkv[:, :, 2], (0, 2, 1, 3))
    dots = jnp.einsum("bhid,bhjd->bhij", q, k) * scale
    attn = jax.nn.softmax(dots, axis=-1)
    out = jnp.einsum("bhij,bhjd->bhid", attn, v)
    out = jnp.transpose(out, (0, 2, 1, 3)).reshape(B, N, D)
    return jnp.einsum("bnd,de->bne", out, w_out) + b_out


if __name__ == "__main__":
    # Small shapes consistent with the ViT Attention module (heads defaults to 8).
    batch, seq, dim, heads = 2, 8, 64, 8

    key = jax.random.PRNGKey(0)
    kx, k1, k2, k3 = jax.random.split(key, 4)

    x = jax.random.normal(kx, (batch, seq, dim), dtype=jnp.float32)
    # y = x @ W layout (transpose of PyTorch nn.Linear's [out, in] weight).
    w_qkv = jax.random.normal(k1, (dim, 3 * dim), dtype=jnp.float32) * (dim ** -0.5)
    w_out = jax.random.normal(k2, (dim, dim), dtype=jnp.float32) * (dim ** -0.5)
    b_out = jax.random.normal(k3, (dim,), dtype=jnp.float32) * 0.01

    out = attention(x, w_qkv, w_out, b_out, heads=heads)
    out = jax.block_until_ready(out)

    ref = _reference(x, w_qkv, w_out, b_out, heads)
    assert out.shape == x.shape and out.dtype == x.dtype
    assert jnp.allclose(out, ref, atol=1e-4, rtol=1e-4), "mismatch vs reference"

    print("KERNEL_OK")
</pallas_src>

<mosaic_0001>
module attributes {stable_mosaic.version = 11 : i64} {
  func.func @_attention_kernel(%arg0: i32, %arg1: memref<1x8x64xf32, #tpu.memory_space<vmem>>, %arg2: memref<64x192xf32, #tpu.memory_space<vmem>>, %arg3: memref<64x64xf32, #tpu.memory_space<vmem>>, %arg4: memref<1x64xf32, #tpu.memory_space<vmem>>, %arg5: memref<1x8x64xf32, #tpu.memory_space<vmem>>) attributes {dimension_semantics = [#tpu.dimension_semantics<parallel>], iteration_bounds = array<i64: 2>, scalar_prefetch = 0 : i64, scratch_operands = 0 : i64, tpu.core_type = #tpu.core_type<tc>, window_params = [{transform_indices = @transform_0, window_bounds = array<i64: 1, 8, 64>}, {pipeline_mode = #tpu.pipeline_mode<synchronous>, transform_indices = @transform_1, window_bounds = array<i64: 64, 192>}, {pipeline_mode = #tpu.pipeline_mode<synchronous>, transform_indices = @transform_2, window_bounds = array<i64: 64, 64>}, {pipeline_mode = #tpu.pipeline_mode<synchronous>, transform_indices = @transform_3, window_bounds = array<i64: 1, 64>}, {transform_indices = @transform_4, window_bounds = array<i64: 1, 8, 64>}]} {
    %c0 = arith.constant 0 : index
    %c0_0 = arith.constant 0 : index
    %c0_1 = arith.constant 0 : index
    %0 = vector.load %arg1[%c0, %c0_0, %c0_1] : memref<1x8x64xf32, #tpu.memory_space<vmem>>, vector<1x8x64xf32>
    %1 = vector.shape_cast %0 : vector<1x8x64xf32> to vector<8x64xf32>
    %c0_2 = arith.constant 0 : index
    %c0_3 = arith.constant 0 : index
    %2 = vector.load %arg2[%c0_2, %c0_3] : memref<64x192xf32, #tpu.memory_space<vmem>>, vector<64x192xf32>
    %cst = arith.constant dense<0.000000e+00> : vector<8x192xf32>
    %3 = tpu.matmul %1, %2, %cst {dimension_numbers = #tpu.dot_dimension_numbers<[1], [0], [0], [1], [0, 0, 1, 1], [], []>} : vector<8x64xf32>, vector<64x192xf32>, vector<8x192xf32> -> vector<8x192xf32>
    %4 = vector.extract_strided_slice %3 {offsets = [0, 0], sizes = [8, 64], strides = [1, 1]} : vector<8x192xf32> to vector<8x64xf32>
    %5 = vector.extract_strided_slice %3 {offsets = [0, 64], sizes = [8, 64], strides = [1, 1]} : vector<8x192xf32> to vector<8x64xf32>
    %6 = vector.extract_strided_slice %3 {offsets = [0, 128], sizes = [8, 64], strides = [1, 1]} : vector<8x192xf32> to vector<8x64xf32>
    %7 = vector.extract_strided_slice %4 {offsets = [0, 0], sizes = [8, 8], strides = [1, 1]} : vector<8x64xf32> to vector<8x8xf32>
    %8 = vector.extract_strided_slice %5 {offsets = [0, 0], sizes = [8, 8], strides = [1, 1]} : vector<8x64xf32> to vector<8x8xf32>
    %9 = vector.extract_strided_slice %6 {offsets = [0, 0], sizes = [8, 8], strides = [1, 1]} : vector<8x64xf32> to vector<8x8xf32>
    %cst_4 = arith.constant dense<0.000000e+00> : vector<8x8xf32>
    %10 = tpu.matmul %7, %8, %cst_4 {dimension_numbers = #tpu.dot_dimension_numbers<[1], [1], [0], [0], [0, 0, 1, 0], [], []>} : vector<8x8xf32>, vector<8x8xf32>, vector<8x8xf32> -> vector<8x8xf32>
    %cst_5 = arith.constant 1.250000e-01 : f32
    %11 = vector.broadcast %cst_5 : f32 to vector<8x8xf32>
    %12 = arith.mulf %10, %11 : vector<8x8xf32>
    %cst_6 = arith.constant dense<0xFF800000> : vector<8xf32>
    %13 = vector.multi_reduction <maximumf>, %12, %cst_6 [1] : vector<8x8xf32> to vector<8xf32>
    %14 = vector.shape_cast %13 : vector<8xf32> to vector<8x1xf32>
    %15 = vector.broadcast %14 : vector<8x1xf32> to vector<8x8xf32>
    %16 = arith.subf %12, %15 : vector<8x8xf32>
    %17 = math.exp %16 : vector<8x8xf32>
    %cst_7 = arith.constant dense<0.000000e+00> : vector<8xf32>
    %18 = vector.multi_reduction <add>, %17, %cst_7 [1] : vector<8x8xf32> to vector<8xf32>
    %19 = vector.shape_cast %18 : vector<8xf32> to vector<8x1xf32>
    %20 = vector.broadcast %19 : vector<8x1xf32> to vector<8x8xf32>
    %21 = arith.divf %17, %20 : vector<8x8xf32>
    %cst_8 = arith.constant dense<0.000000e+00> : vector<8x8xf32>
    %22 = tpu.matmul %21, %9, %cst_8 {dimension_numbers = #tpu.dot_dimension_numbers<[1], [0], [0], [1], [0, 0, 1, 1], [], []>} : vector<8x8xf32>, vector<8x8xf32>, vector<8x8xf32> -> vector<8x8xf32>
    %23 = vector.extract_strided_slice %4 {offsets = [0, 8], sizes = [8, 8], strides = [1, 1]} : vector<8x64xf32> to vector<8x8xf32>
    %24 = vector.extract_strided_slice %5 {offsets = [0, 8], sizes = [8, 8], strides = [1, 1]} : vector<8x64xf32> to vector<8x8xf32>
    %25 = vector.extract_strided_slice %6 {offsets = [0, 8], sizes = [8, 8], strides = [1, 1]} : vector<8x64xf32> to vector<8x8xf32>
    %cst_9 = arith.constant dense<0.000000e+00> : vector<8x8xf32>
    %26 = tpu.matmul %23, %24, %cst_9 {dimension_numbers = #tpu.dot_dimension_numbers<[1], [1], [0], [0], [0, 0, 1, 0], [], []>} : vector<8x8xf32>, vector<8x8xf32>, vector<8x8xf32> -> vector<8x8xf32>
    %cst_10 = arith.constant 1.250000e-01 : f32
    %27 = vector.broadcast %cst_10 : f32 to vector<8x8xf32>
    %28 = arith.mulf %26, %27 : vector<8x8xf32>
    %cst_11 = arith.constant dense<0xFF800000> : vector<8xf32>
    %29 = vector.multi_reduction <maximumf>, %28, %cst_11 [1] : vector<8x8xf32> to vector<8xf32>
    %30 = vector.shape_cast %29 : vector<8xf32> to vector<8x1xf32>
    %31 = vector.broadcast %30 : vector<8x1xf32> to vector<8x8xf32>
    %32 = arith.subf %28, %31 : vector<8x8xf32>
    %33 = math.exp %32 : vector<8x8xf32>
    %cst_12 = arith.constant dense<0.000000e+00> : vector<8xf32>
    %34 = vector.multi_reduction <add>, %33, %cst_12 [1] : vector<8x8xf32> to vector<8xf32>
    %35 = vector.shape_cast %34 : vector<8xf32> to vector<8x1xf32>
    %36 = vector.broadcast %35 : vector<8x1xf32> to vector<8x8xf32>
    %37 = arith.divf %33, %36 : vector<8x8xf32>
    %cst_13 = arith.constant dense<0.000000e+00> : vector<8x8xf32>
    %38 = tpu.matmul %37, %25, %cst_13 {dimension_numbers = #tpu.dot_dimension_numbers<[1], [0], [0], [1], [0, 0, 1, 1], [], []>} : vector<8x8xf32>, vector<8x8xf32>, vector<8x8xf32> -> vector<8x8xf32>
    %39 = vector.extract_strided_slice %4 {offsets = [0, 16], sizes = [8, 8], strides = [1, 1]} : vector<8x64xf32> to vector<8x8xf32>
    %40 = vector.extract_strided_slice %5 {offsets = [0, 16], sizes = [8, 8], strides = [1, 1]} : vector<8x64xf32> to vector<8x8xf32>
    %41 = vector.extract_strided_slice %6 {offsets = [0, 16], sizes = [8, 8], strides = [1, 1]} : vector<8x64xf32> to vector<8x8xf32>
    %cst_14 = arith.constant dense<0.000000e+00> : vector<8x8xf32>
    %42 = tpu.matmul %39, %40, %cst_14 {dimension_numbers = #tpu.dot_dimension_numbers<[1], [1], [0], [0], [0, 0, 1, 0], [], []>} : vector<8x8xf32>, vector<8x8xf32>, vector<8x8xf32> -> vector<8x8xf32>
    %cst_15 = arith.constant 1.250000e-01 : f32
    %43 = vector.broadcast %cst_15 : f32 to vector<8x8xf32>
    %44 = arith.mulf %42, %43 : vector<8x8xf32>
    %cst_16 = arith.constant dense<0xFF800000> : vector<8xf32>
    %45 = vector.multi_reduction <maximumf>, %44, %cst_16 [1] : vector<8x8xf32> to vector<8xf32>
    %46 = vector.shape_cast %45 : vector<8xf32> to vector<8x1xf32>
    %47 = vector.broadcast %46 : vector<8x1xf32> to vector<8x8xf32>
    %48 = arith.subf %44, %47 : vector<8x8xf32>
    %49 = math.exp %48 : vector<8x8xf32>
    %cst_17 = arith.constant dense<0.000000e+00> : vector<8xf32>
    %50 = vector.multi_reduction <add>, %49, %cst_17 [1] : vector<8x8xf32> to vector<8xf32>
    %51 = vector.shape_cast %50 : vector<8xf32> to vector<8x1xf32>
    %52 = vector.broadcast %51 : vector<8x1xf32> to vector<8x8xf32>
    %53 = arith.divf %49, %52 : vector<8x8xf32>
    %cst_18 = arith.constant dense<0.000000e+00> : vector<8x8xf32>
    %54 = tpu.matmul %53, %41, %cst_18 {dimension_numbers = #tpu.dot_dimension_numbers<[1], [0], [0], [1], [0, 0, 1, 1], [], []>} : vector<8x8xf32>, vector<8x8xf32>, vector<8x8xf32> -> vector<8x8xf32>
    %55 = vector.extract_strided_slice %4 {offsets = [0, 24], sizes = [8, 8], strides = [1, 1]} : vector<8x64xf32> to vector<8x8xf32>
    %56 = vector.extract_strided_slice %5 {offsets = [0, 24], sizes = [8, 8], strides = [1, 1]} : vector<8x64xf32> to vector<8x8xf32>
    %57 = vector.extract_strided_slice %6 {offsets = [0, 24], sizes = [8, 8], strides = [1, 1]} : vector<8x64xf32> to vector<8x8xf32>
    %cst_19 = arith.constant dense<0.000000e+00> : vector<8x8xf32>
    %58 = tpu.matmul %55, %56, %cst_19 {dimension_numbers = #tpu.dot_dimension_numbers<[1], [1], [0], [0], [0, 0, 1, 0], [], []>} : vector<8x8xf32>, vector<8x8xf32>, vector<8x8xf32> -> vector<8x8xf32>
    %cst_20 = arith.constant 1.250000e-01 : f32
    %59 = vector.broadcast %cst_20 : f32 to vector<8x8xf32>
    %60 = arith.mulf %58, %59 : vector<8x8xf32>
    %cst_21 = arith.constant dense<0xFF800000> : vector<8xf32>
    %61 = vector.multi_reduction <maximumf>, %60, %cst_21 [1] : vector<8x8xf32> to vector<8xf32>
    %62 = vector.shape_cast %61 : vector<8xf32> to vector<8x1xf32>
    %63 = vector.broadcast %62 : vector<8x1xf32> to vector<8x8xf32>
    %64 = arith.subf %60, %63 : vector<8x8xf32>
    %65 = math.exp %64 : vector<8x8xf32>
    %cst_22 = arith.constant dense<0.000000e+00> : vector<8xf32>
    %66 = vector.multi_reduction <add>, %65, %cst_22 [1] : vector<8x8xf32> to vector<8xf32>
    %67 = vector.shape_cast %66 : vector<8xf32> to vector<8x1xf32>
    %68 = vector.broadcast %67 : vector<8x1xf32> to vector<8x8xf32>
    %69 = arith.divf %65, %68 : vector<8x8xf32>
    %cst_23 = arith.constant dense<0.000000e+00> : vector<8x8xf32>
    %70 = tpu.matmul %69, %57, %cst_23 {dimension_numbers = #tpu.dot_dimension_numbers<[1], [0], [0], [1], [0, 0, 1, 1], [], []>} : vector<8x8xf32>, vector<8x8xf32>, vector<8x8xf32> -> vector<8x8xf32>
    %71 = vector.extract_strided_slice %4 {offsets = [0, 32], sizes = [8, 8], strides = [1, 1]} : vector<8x64xf32> to vector<8x8xf32>
    %72 = vector.extract_strided_slice %5 {offsets = [0, 32], sizes = [8, 8], strides = [1, 1]} : vector<8x64xf32> to vector<8x8xf32>
    %73 = vector.extract_strided_slice %6 {offsets = [0, 32], sizes = [8, 8], strides = [1, 1]} : vector<8x64xf32> to vector<8x8xf32>
    %cst_24 = arith.constant dense<0.000000e+00> : vector<8x8xf32>
    %74 = tpu.matmul %71, %72, %cst_24 {dimension_numbers = #tpu.dot_dimension_numbers<[1], [1], [0], [0], [0, 0, 1, 0], [], []>} : vector<8x8xf32>, vector<8x8xf32>, vector<8x8xf32> -> vector<8x8xf32>
    %cst_25 = arith.constant 1.250000e-01 : f32
    %75 = vector.broadcast %cst_25 : f32 to vector<8x8xf32>
    %76 = arith.mulf %74, %75 : vector<8x8xf32>
    %cst_26 = arith.constant dense<0xFF800000> : vector<8xf32>
    %77 = vector.multi_reduction <maximumf>, %76, %cst_26 [1] : vector<8x8xf32> to vector<8xf32>
    %78 = vector.shape_cast %77 : vector<8xf32> to vector<8x1xf32>
    %79 = vector.broadcast %78 : vector<8x1xf32> to vector<8x8xf32>
    %80 = arith.subf %76, %79 : vector<8x8xf32>
    %81 = math.exp %80 : vector<8x8xf32>
    %cst_27 = arith.constant dense<0.000000e+00> : vector<8xf32>
    %82 = vector.multi_reduction <add>, %81, %cst_27 [1] : vector<8x8xf32> to vector<8xf32>
    %83 = vector.shape_cast %82 : vector<8xf32> to vector<8x1xf32>
    %84 = vector.broadcast %83 : vector<8x1xf32> to vector<8x8xf32>
    %85 = arith.divf %81, %84 : vector<8x8xf32>
    %cst_28 = arith.constant dense<0.000000e+00> : vector<8x8xf32>
    %86 = tpu.matmul %85, %73, %cst_28 {dimension_numbers = #tpu.dot_dimension_numbers<[1], [0], [0], [1], [0, 0, 1, 1], [], []>} : vector<8x8xf32>, vector<8x8xf32>, vector<8x8xf32> -> vector<8x8xf32>
    %87 = vector.extract_strided_slice %4 {offsets = [0, 40], sizes = [8, 8], strides = [1, 1]} : vector<8x64xf32> to vector<8x8xf32>
    %88 = vector.extract_strided_slice %5 {offsets = [0, 40], sizes = [8, 8], strides = [1, 1]} : vector<8x64xf32> to vector<8x8xf32>
    %89 = vector.extract_strided_slice %6 {offsets = [0, 40], sizes = [8, 8], strides = [1, 1]} : vector<8x64xf32> to vector<8x8xf32>
    %cst_29 = arith.constant dense<0.000000e+00> : vector<8x8xf32>
    %90 = tpu.matmul %87, %88, %cst_29 {dimension_numbers = #tpu.dot_dimension_numbers<[1], [1], [0], [0], [0, 0, 1, 0], [], []>} : vector<8x8xf32>, vector<8x8xf32>, vector<8x8xf32> -> vector<8x8xf32>
    %cst_30 = arith.constant 1.250000e-01 : f32
    %91 = vector.broadcast %cst_30 : f32 to vector<8x8xf32>
    %92 = arith.mulf %90, %91 : vector<8x8xf32>
    %cst_31 = arith.constant dense<0xFF800000> : vector<8xf32>
    %93 = vector.multi_reduction <maximumf>, %92, %cst_31 [1] : vector<8x8xf32> to vector<8xf32>
    %94 = vector.shape_cast %93 : vector<8xf32> to vector<8x1xf32>
    %95 = vector.broadcast %94 : vector<8x1xf32> to vector<8x8xf32>
    %96 = arith.subf %92, %95 : vector<8x8xf32>
    %97 = math.exp %96 : vector<8x8xf32>
    %cst_32 = arith.constant dense<0.000000e+00> : vector<8xf32>
    %98 = vector.multi_reduction <add>, %97, %cst_32 [1] : vector<8x8xf32> to vector<8xf32>
    %99 = vector.shape_cast %98 : vector<8xf32> to vector<8x1xf32>
    %100 = vector.broadcast %99 : vector<8x1xf32> to vector<8x8xf32>
    %101 = arith.divf %97, %100 : vector<8x8xf32>
    %cst_33 = arith.constant dense<0.000000e+00> : vector<8x8xf32>
    %102 = tpu.matmul %101, %89, %cst_33 {dimension_numbers = #tpu.dot_dimension_numbers<[1], [0], [0], [1], [0, 0, 1, 1], [], []>} : vector<8x8xf32>, vector<8x8xf32>, vector<8x8xf32> -> vector<8x8xf32>
    %103 = vector.extract_strided_slice %4 {offsets = [0, 48], sizes = [8, 8], strides = [1, 1]} : vector<8x64xf32> to vector<8x8xf32>
    %104 = vector.extract_strided_slice %5 {offsets = [0, 48], sizes = [8, 8], strides = [1, 1]} : vector<8x64xf32> to vector<8x8xf32>
    %105 = vector.extract_strided_slice %6 {offsets = [0, 48], sizes = [8, 8], strides = [1, 1]} : vector<8x64xf32> to vector<8x8xf32>
    %cst_34 = arith.constant dense<0.000000e+00> : vector<8x8xf32>
    %106 = tpu.matmul %103, %104, %cst_34 {dimension_numbers = #tpu.dot_dimension_numbers<[1], [1], [0], [0], [0, 0, 1, 0], [], []>} : vector<8x8xf32>, vector<8x8xf32>, vector<8x8xf32> -> vector<8x8xf32>
    %cst_35 = arith.constant 1.250000e-01 : f32
    %107 = vector.broadcast %cst_35 : f32 to vector<8x8xf32>
    %108 = arith.mulf %106, %107 : vector<8x8xf32>
    %cst_36 = arith.constant dense<0xFF800000> : vector<8xf32>
    %109 = vector.multi_reduction <maximumf>, %108, %cst_36 [1] : vector<8x8xf32> to vector<8xf32>
    %110 = vector.shape_cast %109 : vector<8xf32> to vector<8x1xf32>
    %111 = vector.broadcast %110 : vector<8x1xf32> to vector<8x8xf32>
    %112 = arith.subf %108, %111 : vector<8x8xf32>
    %113 = math.exp %112 : vector<8x8xf32>
    %cst_37 = arith.constant dense<0.000000e+00> : vector<8xf32>
    %114 = vector.multi_reduction <add>, %113, %cst_37 [1] : vector<8x8xf32> to vector<8xf32>
    %115 = vector.shape_cast %114 : vector<8xf32> to vector<8x1xf32>
    %116 = vector.broadcast %115 : vector<8x1xf32> to vector<8x8xf32>
    %117 = arith.divf %113, %116 : vector<8x8xf32>
    %cst_38 = arith.constant dense<0.000000e+00> : vector<8x8xf32>
    %118 = tpu.matmul %117, %105, %cst_38 {dimension_numbers = #tpu.dot_dimension_numbers<[1], [0], [0], [1], [0, 0, 1, 1], [], []>} : vector<8x8xf32>, vector<8x8xf32>, vector<8x8xf32> -> vector<8x8xf32>
    %119 = vector.extract_strided_slice %4 {offsets = [0, 56], sizes = [8, 8], strides = [1, 1]} : vector<8x64xf32> to vector<8x8xf32>
    %120 = vector.extract_strided_slice %5 {offsets = [0, 56], sizes = [8, 8], strides = [1, 1]} : vector<8x64xf32> to vector<8x8xf32>
    %121 = vector.extract_strided_slice %6 {offsets = [0, 56], sizes = [8, 8], strides = [1, 1]} : vector<8x64xf32> to vector<8x8xf32>
    %cst_39 = arith.constant dense<0.000000e+00> : vector<8x8xf32>
    %122 = tpu.matmul %119, %120, %cst_39 {dimension_numbers = #tpu.dot_dimension_numbers<[1], [1], [0], [0], [0, 0, 1, 0], [], []>} : vector<8x8xf32>, vector<8x8xf32>, vector<8x8xf32> -> vector<8x8xf32>
    %cst_40 = arith.constant 1.250000e-01 : f32
    %123 = vector.broadcast %cst_40 : f32 to vector<8x8xf32>
    %124 = arith.mulf %122, %123 : vector<8x8xf32>
    %cst_41 = arith.constant dense<0xFF800000> : vector<8xf32>
    %125 = vector.multi_reduction <maximumf>, %124, %cst_41 [1] : vector<8x8xf32> to vector<8xf32>
    %126 = vector.shape_cast %125 : vector<8xf32> to vector<8x1xf32>
    %127 = vector.broadcast %126 : vector<8x1xf32> to vector<8x8xf32>
    %128 = arith.subf %124, %127 : vector<8x8xf32>
    %129 = math.exp %128 : vector<8x8xf32>
    %cst_42 = arith.constant dense<0.000000e+00> : vector<8xf32>
    %130 = vector.multi_reduction <add>, %129, %cst_42 [1] : vector<8x8xf32> to vector<8xf32>
    %131 = vector.shape_cast %130 : vector<8xf32> to vector<8x1xf32>
    %132 = vector.broadcast %131 : vector<8x1xf32> to vector<8x8xf32>
    %133 = arith.divf %129, %132 : vector<8x8xf32>
    %cst_43 = arith.constant dense<0.000000e+00> : vector<8x8xf32>
    %134 = tpu.matmul %133, %121, %cst_43 {dimension_numbers = #tpu.dot_dimension_numbers<[1], [0], [0], [1], [0, 0, 1, 1], [], []>} : vector<8x8xf32>, vector<8x8xf32>, vector<8x8xf32> -> vector<8x8xf32>
    %135 = tpu.concatenate %22, %38, %54, %70, %86, %102, %118, %134 in 1 : vector<8x8xf32>, vector<8x8xf32>, vector<8x8xf32>, vector<8x8xf32>, vector<8x8xf32>, vector<8x8xf32>, vector<8x8xf32>, vector<8x8xf32> -> vector<8x64xf32>
    %c0_44 = arith.constant 0 : index
    %c0_45 = arith.constant 0 : index
    %136 = vector.load %arg3[%c0_44, %c0_45] : memref<64x64xf32, #tpu.memory_space<vmem>>, vector<64x64xf32>
    %cst_46 = arith.constant dense<0.000000e+00> : vector<8x64xf32>
    %137 = tpu.matmul %135, %136, %cst_46 {dimension_numbers = #tpu.dot_dimension_numbers<[1], [0], [0], [1], [0, 0, 1, 1], [], []>} : vector<8x64xf32>, vector<64x64xf32>, vector<8x64xf32> -> vector<8x64xf32>
    %c0_47 = arith.constant 0 : index
    %c0_48 = arith.constant 0 : index
    %138 = vector.load %arg4[%c0_47, %c0_48] : memref<1x64xf32, #tpu.memory_space<vmem>>, vector<1x64xf32>
    %139 = vector.broadcast %138 : vector<1x64xf32> to vector<8x64xf32>
    %140 = arith.addf %137, %139 : vector<8x64xf32>
    %c0_49 = arith.constant 0 : index
    %c0_50 = arith.constant 0 : index
    %c0_51 = arith.constant 0 : index
    %141 = vector.load %arg5[%c0_49, %c0_50, %c0_51] : memref<1x8x64xf32, #tpu.memory_space<vmem>>, vector<1x8x64xf32>
    %142 = vector.shape_cast %141 : vector<1x8x64xf32> to vector<8x64xf32>
    %143 = vector.shape_cast %140 : vector<8x64xf32> to vector<1x8x64xf32>
    tpu.vector_store %arg5[%c0_49, %c0_50, %c0_51], %143 {strides = array<i32>} : memref<1x8x64xf32, #tpu.memory_space<vmem>>, vector<1x8x64xf32>,
    return
  }
  func.func @transform_0(%arg0: i32) -> (i32, i32, i32) {
    %c0_i32 = arith.constant 0 : i32
    %c0_i32_0 = arith.constant 0 : i32
    %c0_i32_1 = arith.constant 0 : i32
    return %arg0, %c0_i32, %c0_i32_0 : i32, i32, i32
  }
  func.func @transform_1(%arg0: i32) -> (i32, i32) {
    %c0_i32 = arith.constant 0 : i32
    %c0_i32_0 = arith.constant 0 : i32
    %c0_i32_1 = arith.constant 0 : i32
    return %c0_i32, %c0_i32_0 : i32, i32
  }
  func.func @transform_2(%arg0: i32) -> (i32, i32) {
    %c0_i32 = arith.constant 0 : i32
    %c0_i32_0 = arith.constant 0 : i32
    %c0_i32_1 = arith.constant 0 : i32
    return %c0_i32, %c0_i32_0 : i32, i32
  }
  func.func @transform_3(%arg0: i32) -> (i32, i32) {
    %c0_i32 = arith.constant 0 : i32
    %c0_i32_0 = arith.constant 0 : i32
    %c0_i32_1 = arith.constant 0 : i32
    return %c0_i32, %c0_i32_0 : i32, i32
  }
  func.func @transform_4(%arg0: i32) -> (i32, i32, i32) {
    %c0_i32 = arith.constant 0 : i32
    %c0_i32_0 = arith.constant 0 : i32
    %c0_i32_1 = arith.constant 0 : i32
    return %arg0, %c0_i32, %c0_i32_0 : i32, i32, i32
  }
}

</mosaic_0001>

<llo_original>
// kernel: tpu_custom_call.1
$region0: #{tpu_custom_call.1}
  #allocation0 [shape = 'u32[]', space=smem, size = 0x4, offset = 0x4, fixed_abs, tag = 'smem constant byte address 0x4 - core index']
  #allocation1 [shape = 'u32[72,128]{1,0:T(1,128)}', space=vmem, size = 0x9000, scoped, tag = 'internal scratch']
  %s0 = inlined_call_operand.hbm [shape: f32[2,8,64], index: 0, kind: input, shape index: {}]
  %s1 = inlined_call_operand.hbm [shape: f32[64,192], index: 1, kind: input, shape index: {}]
  %s2 = inlined_call_operand.hbm [shape: f32[64,64], index: 2, kind: input, shape index: {}]
  %s3 = inlined_call_operand.vmem [shape: f32[1,64], index: 3, kind: input, shape index: {}]
  %s4 = inlined_call_operand.hbm [shape: f32[2,8,64], index: 4, kind: output, shape index: {}]
  %s5 = sld [smem:[#allocation0]]
  $region61: #{tpu_custom_call.1} parent=0
    _
  %s7 = ssub.s32 1, %s5
  %s8 = scalar_select 0, %s7, %s5
  $region1: #{tpu_custom_call.1} parent=0
    #allocation2 [shape = 'u8[8192]{0}', space=vmem, size = 0x2000, scoped, tag = 'input window, operand 0']
    #allocation3 [shape = 's32[2]{0}', space=sflag, size = 0x8, scoped, tag = 'scoped memory for tpu_custom_call.1']
    #allocation4 [shape = 's32[2]{0}', space=sflag, size = 0x8, scoped, tag = 'scoped memory for tpu_custom_call.1']
    #allocation5 [shape = 'u8[65536]{0}', space=vmem, size = 0x10000, scoped, tag = 'input window, operand 1, single buffered']
    #allocation6 [shape = 's32[1]{0}', space=sflag, size = 0x4, scoped, tag = 'scoped memory for tpu_custom_call.1']
    #allocation7 [shape = 'u8[32768]{0}', space=vmem, size = 0x8000, scoped, tag = 'input window, operand 2, single buffered']
    #allocation8 [shape = 'u8[8192]{0}', space=vmem, size = 0x2000, scoped, tag = 'output window, operand 0']
    %9 = vsyncpa [#allocation3], 0
    %s10 = scalar_lea.sflag [#allocation3], 1
    %11 = vsyncpa %s10, 0
    %12 = vsyncpa [#allocation6], 0
    %13 = vsyncpa [#allocation4], 0
    %s14 = scalar_lea.sflag [#allocation4], 1
    %15 = vsyncpa %s14, 0
    loop: start=0, step=1, limit=4
    $region2: #{tpu_custom_call.1} parent=1 // loop_pre_header
      _
    $region3: #{tpu_custom_call.1} parent=1 // loop_header
      %s17 = sphi 0, %s21
      %p18 = scmp.ge.s32.totalorder %s17, 4
      %s27 = sphi 0, %s29
      %s30 = sphi 0, %s27
      %s31 = sphi 0, %s30
      %s47 = sphi 0, %s31
      %s51 = sphi 0, %s51
      %s53 = sphi 0, %s51
      %s54 = sphi 0, %s53
      %s68 = sphi 0, %s54
      %s72 = sphi 0, %s72
      %s74 = sphi 0, %s72
      %s75 = sphi 0, %s74
      %s89 = sphi 0, %s75
      %s93 = sphi 0, %s93
      %s95 = sphi 0, %s93
      %s96 = sphi 0, %s95
      %s110 = sphi 0, %s96
      %s116 = sphi 0, %s118
      %s119 = sphi 0, %s116
      %s120 = sphi 0, %s119
      %s136 = sphi 0, %s120
    $region4: #{tpu_custom_call.1} parent=1 // loop_header_branch
      %20 = sbr.rel (%p18) target = $region8
    $region5: #{tpu_custom_call.1} parent=1 // loop_body
      %s22 = ssub.s32 %s17, 1
      %s23 = ssub.s32 %s17, 2
      %s24 = sadd.s32 %s17, 1
      %s25 = ssub.s32 %s17, %s24
      %p26 = scmp.eq.s32.totalorder %s25, 0
      %s28 = sadd.s32 %s27, 1
      %s29 = scalar_select %p26, %s27, %s28
      %p32 = pneg %p26
      %p33 = scmp.eq.s32.totalorder %s17, 1
      %p34 = por %p32, %p33
      %p35 = scmp.ne.s32.totalorder %s27, %s30
      %p36 = scmp.eq.s32.totalorder %s17, 0
      %p37 = por %p35, %p36
      %p38 = scmp.ne.s32.totalorder %s27, %s30
      %p39 = scmp.eq.s32.totalorder %s22, 1
      %p40 = por %p38, %p39
      %p41 = scmp.ne.s32.totalorder %s30, %s31
      %p42 = scmp.eq.s32.totalorder %s22, 0
      %p43 = por %p41, %p42
      %p44 = scmp.ne.s32.totalorder %s30, %s31
      %p45 = scmp.eq.s32.totalorder %s23, 1
      %p46 = por %p44, %p45
      %p48 = scmp.ne.s32.totalorder %s31, %s47
      %p49 = scmp.eq.s32.totalorder %s23, 0
      %p50 = por %p48, %p49
      %s52 = sadd.s32 %s51, 1
      %p55 = scmp.eq.s32.totalorder %s17, 1
      %p56 = scmp.ne.s32.totalorder %s51, %s53
      %p57 = scmp.eq.s32.totalorder %s17, 0
      %p58 = por %p56, %p57
      %p59 = scmp.ne.s32.totalorder %s51, %s53
      %p60 = scmp.eq.s32.totalorder %s22, 1
      %p61 = por %p59, %p60
      %p62 = scmp.ne.s32.totalorder %s53, %s54
      %p63 = scmp.eq.s32.totalorder %s22, 0
      %p64 = por %p62, %p63
      %p65 = scmp.ne.s32.totalorder %s53, %s54
      %p66 = scmp.eq.s32.totalorder %s23, 1
      %p67 = por %p65, %p66
      %p69 = scmp.ne.s32.totalorder %s54, %s68
      %p70 = scmp.eq.s32.totalorder %s23, 0
      %p71 = por %p69, %p70
      %s73 = sadd.s32 %s72, 1
      %p76 = scmp.eq.s32.totalorder %s17, 1
      %p77 = scmp.ne.s32.totalorder %s72, %s74
      %p78 = scmp.eq.s32.totalorder %s17, 0
      %p79 = por %p77, %p78
      %p80 = scmp.ne.s32.totalorder %s72, %s74
      %p81 = scmp.eq.s32.totalorder %s22, 1
      %p82 = por %p80, %p81
      %p83 = scmp.ne.s32.totalorder %s74, %s75
      %p84 = scmp.eq.s32.totalorder %s22, 0
      %p85 = por %p83, %p84
      %p86 = scmp.ne.s32.totalorder %s74, %s75
      %p87 = scmp.eq.s32.totalorder %s23, 1
      %p88 = por %p86, %p87
      %p90 = scmp.ne.s32.totalorder %s75, %s89
      %p91 = scmp.eq.s32.totalorder %s23, 0
      %p92 = por %p90, %p91
      %s94 = sadd.s32 %s93, 1
      %p97 = scmp.eq.s32.totalorder %s17, 1
      %p98 = scmp.ne.s32.totalorder %s93, %s95
      %p99 = scmp.eq.s32.totalorder %s17, 0
      %p100 = por %p98, %p99
      %p101 = scmp.ne.s32.totalorder %s93, %s95
      %p102 = scmp.eq.s32.totalorder %s22, 1
      %p103 = por %p101, %p102
      %p104 = scmp.ne.s32.totalorder %s95, %s96
      %p105 = scmp.eq.s32.totalorder %s22, 0
      %p106 = por %p104, %p105
      %p107 = scmp.ne.s32.totalorder %s95, %s96
      %p108 = scmp.eq.s32.totalorder %s23, 1
      %p109 = por %p107, %p108
      %p111 = scmp.ne.s32.totalorder %s96, %s110
      %p112 = scmp.eq.s32.totalorder %s23, 0
      %p113 = por %p111, %p112
      %s114 = ssub.s32 %s17, %s24
      %p115 = scmp.eq.s32.totalorder %s114, 0
      %s117 = sadd.s32 %s116, 1
      %s118 = scalar_select %p115, %s116, %s117
      %p121 = pneg %p115
      %p122 = scmp.eq.s32.totalorder %s17, 1
      %p123 = por %p121, %p122
      %p124 = scmp.ne.s32.totalorder %s116, %s119
      %p125 = scmp.eq.s32.totalorder %s17, 0
      %p126 = por %p124, %p125
      %p127 = scmp.ne.s32.totalorder %s116, %s119
      %p128 = scmp.eq.s32.totalorder %s22, 1
      %p129 = por %p127, %p128
      %p130 = scmp.ne.s32.totalorder %s119, %s120
      %p131 = scmp.eq.s32.totalorder %s22, 0
      %p132 = por %p130, %p131
      %p133 = scmp.ne.s32.totalorder %s119, %s120
      %p134 = scmp.eq.s32.totalorder %s23, 1
      %p135 = por %p133, %p134
      %p137 = scmp.ne.s32.totalorder %s120, %s136
      %p138 = scmp.eq.s32.totalorder %s23, 0
      %p139 = por %p137, %p138
      %p140 = scmp.le.s32.totalorder 1, %s17
      %p141 = scmp.lt.s32.totalorder %s17, 3
      %p142 = pnand %p140, %p141
      %p143 = pneg %p142
      // Predicated region
      $region9: #{tpu_custom_call.1} parent=5 // pred_check
        _
      $region10: #{tpu_custom_call.1} parent=5 // pred_check_branch
        %145 = sbr.rel (%p142) target = $region12
      $region11: #{tpu_custom_call.1} parent=5 // pred_region
        %s146 = ssub.s32 %s17, 1
        // Predicated region
        $region13: #{tpu_custom_call.1} parent=11 // pred_check
          %p147 = pneg %p64
        $region14: #{tpu_custom_call.1} parent=11 // pred_check_branch
          %149 = sbr.rel (%p147) target = $region16
        $region15: #{tpu_custom_call.1} parent=11 // pred_region
          %151 = vsyncadd [#allocation6], 0
          %s152 = sshll.u32 %s1, 4
          %s153 = int_to_ptr.hbm [resolvable:$true] %s152
          %s154 = sshll.u32 [#allocation5], 4
          %s155 = int_to_ptr.vmem [resolvable:$true] %s154
          %160 = dma.hbm_to_vmem [thread:$0]  %s153, 2048, %s155, [#allocation6], 256, 256, 16
        $region16: #{tpu_custom_call.1} parent=11 // pred_fallthru
          _
        // Predicated region
        $region17: #{tpu_custom_call.1} parent=11 // pred_check
          %p161 = pneg %p85
        $region18: #{tpu_custom_call.1} parent=11 // pred_check_branch
          %163 = sbr.rel (%p161) target = $region20
        $region19: #{tpu_custom_call.1} parent=11 // pred_region
          %165 = vsyncadd [#allocation6], 0
          %s166 = sshll.u32 %s2, 4
          %s167 = int_to_ptr.hbm [resolvable:$true] %s166
          %s168 = sshll.u32 [#allocation7], 4
          %s169 = int_to_ptr.vmem [resolvable:$true] %s168
          %174 = dma.hbm_to_vmem [thread:$0]  %s167, 1024, %s169, [#allocation6], 128, 128, 8
        $region20: #{tpu_custom_call.1} parent=11 // pred_fallthru
          _
        // Predicated region
        $region21: #{tpu_custom_call.1} parent=11 // pred_check
          %p175 = pneg %p106
        $region22: #{tpu_custom_call.1} parent=11 // pred_check_branch
          %177 = sbr.rel (%p175) target = $region24
        $region23: #{tpu_custom_call.1} parent=11 // pred_region
          _
        $region24: #{tpu_custom_call.1} parent=11 // pred_fallthru
          _
      $region12: #{tpu_custom_call.1} parent=5 // pred_fallthru
        _
      %p178 = scmp.lt.s32.totalorder %s17, 2
      // Predicated region
      $region25: #{tpu_custom_call.1} parent=5 // pred_check
        %p179 = pneg %p178
      $region26: #{tpu_custom_call.1} parent=5 // pred_check_branch
        %181 = sbr.rel (%p179) target = $region28
      $region27: #{tpu_custom_call.1} parent=5 // pred_region
        // Predicated region
        $region29: #{tpu_custom_call.1} parent=27 // pred_check
          %p182 = pneg %p37
        $region30: #{tpu_custom_call.1} parent=27 // pred_check_branch
          %184 = sbr.rel (%p182) target = $region32
        $region31: #{tpu_custom_call.1} parent=27 // pred_region
          %s185 = sand.u32 %s27, 1
          %s186 = scalar_lea.sflag [#allocation3], %s185
          %s187 = sand.u32 %s27, 1
          %s188 = smul.addr %s187, 8
          %s189 = scalar_lea.vmem [#allocation2], %s188
          %191 = vsyncadd %s186, 0
          %s192 = smul.addr %s17, 8
          %s193 = scalar_lea.hbm %s0, %s192
          %s195 = sshll.u32 %s193, 4
          %s196 = int_to_ptr.hbm [resolvable:$true] %s195
          %s197 = sshll.u32 %s189, 4
          %s198 = int_to_ptr.vmem [resolvable:$true] %s197
          %200 = dma.hbm_to_vmem [thread:$0]  %s196, 128, %s198, %s186
        $region32: #{tpu_custom_call.1} parent=27 // pred_fallthru
          _
      $region28: #{tpu_custom_call.1} parent=5 // pred_fallthru
        _
      %p201 = scmp.le.s32.totalorder 1, %s17
      %p202 = scmp.lt.s32.totalorder %s17, 3
      %p203 = pnand %p201, %p202
      %p204 = pneg %p203
      // Predicated region
      $region33: #{tpu_custom_call.1} parent=5 // pred_check
        _
      $region34: #{tpu_custom_call.1} parent=5 // pred_check_branch
        %206 = sbr.rel (%p203) target = $region36
      $region35: #{tpu_custom_call.1} parent=5 // pred_region
        %s207 = ssub.s32 %s17, 1
        %s208 = sand.u32 %s30, 1
        %s209 = scalar_lea.sflag [#allocation3], %s208
        %s210 = sand.u32 %s30, 1
        %s211 = smul.addr %s210, 8
        %s212 = scalar_lea.vmem [#allocation2], %s211
        // Predicated region
        $region37: #{tpu_custom_call.1} parent=35 // pred_check
          %p213 = pneg %p43
        $region38: #{tpu_custom_call.1} parent=35 // pred_check_branch
          %215 = sbr.rel (%p213) target = $region40
        $region39: #{tpu_custom_call.1} parent=35 // pred_region
          %217 = dma.done %s209, 128
        $region40: #{tpu_custom_call.1} parent=35 // pred_fallthru
          _
        // Predicated region
        $region41: #{tpu_custom_call.1} parent=35 // pred_check
          %p218 = pneg %p64
        $region42: #{tpu_custom_call.1} parent=35 // pred_check_branch
          %220 = sbr.rel (%p218) target = $region44
        $region43: #{tpu_custom_call.1} parent=35 // pred_region
          %222 = dma.done [#allocation6], 2048
        $region44: #{tpu_custom_call.1} parent=35 // pred_fallthru
          _
        // Predicated region
        $region45: #{tpu_custom_call.1} parent=35 // pred_check
          %p223 = pneg %p85
        $region46: #{tpu_custom_call.1} parent=35 // pred_check_branch
          %225 = sbr.rel (%p223) target = $region48
        $region47: #{tpu_custom_call.1} parent=35 // pred_region
          %227 = dma.done [#allocation6], 1024
        $region48: #{tpu_custom_call.1} parent=35 // pred_fallthru
          _
        %s228 = sand.u32 %s30, 1
        %s229 = scalar_lea.sflag [#allocation3], %s228
        %s230 = sand.u32 %s30, 1
        %s231 = smul.addr %s230, 8
        %s232 = scalar_lea.vmem [#allocation2], %s231
        %p233 = pneg %p43
        %p234 = pneg %p40
        %p235 = pneg %p64
        %p236 = pneg %p61
        %p237 = pneg %p85
        %p238 = pneg %p82
        %p239 = pneg %p106
        %p240 = pneg %p103
        %p241 = pneg %p132
        %p242 = pneg %p129
        %s243 = sand.u32 %s119, 1
        %s244 = scalar_lea.sflag [#allocation4], %s243
        %s245 = sand.u32 %s119, 1
        %s246 = smul.addr %s245, 8
        %s247 = scalar_lea.vmem [#allocation8], %s246
        %v248 = vld [vmem:[%s212] sm:$0xff]
        %v249 = vld [vmem:[#allocation5] sm:$0xff]
        %v250 = vld [vmem:[#allocation5 + $0x8] sm:$0xff]
        %v251 = vld [vmem:[#allocation5 + $0x10] sm:$0xff]
        %v252 = vld [vmem:[#allocation5 + $0x18] sm:$0xff]
        %v253 = vld [vmem:[#allocation5 + $0x20] sm:$0xff]
        %v254 = vld [vmem:[#allocation5 + $0x28] sm:$0xff]
        %v255 = vld [vmem:[#allocation5 + $0x30] sm:$0xff]
        %v256 = vld [vmem:[#allocation5 + $0x38] sm:$0xff]
        %v257 = vld [vmem:[#allocation5 + $0x40] sm:$0xff]
        %v258 = vld [vmem:[#allocation5 + $0x48] sm:$0xff]
        %v259 = vld [vmem:[#allocation5 + $0x50] sm:$0xff]
        %v260 = vld [vmem:[#allocation5 + $0x58] sm:$0xff]
        %v261 = vld [vmem:[#allocation5 + $0x60] sm:$0xff]
        %v262 = vld [vmem:[#allocation5 + $0x68] sm:$0xff]
        %v263 = vld [vmem:[#allocation5 + $0x70] sm:$0xff]
        %v264 = vld [vmem:[#allocation5 + $0x78] sm:$0xff]
        %vm265 = vcmask 523264
        %v267 = vsel %vm265, %v248, 0
        %269 = vmatpush.msra.mxu0 0.0
        %270 = vmatpush.msra.mxu0 0.0
        %271 = vmatpush.msra.mxu0 0.0
        %272 = vmatpush.msra.mxu0 0.0
        %273 = vmatpush.msra.mxu0 0.0
        %274 = vmatpush.msra.mxu0 0.0
        %275 = vmatpush.msra.mxu0 0.0
        %276 = vmatpush.msra.mxu0 0.0
        %277 = vmatpush.msra.mxu0 %v263
        %278 = vmatpush.msra.mxu0 %v261
        %279 = vmatpush.msra.mxu0 %v259
        %280 = vmatpush.msra.mxu0 %v257
        %281 = vmatpush.msra.mxu0 %v255
        %282 = vmatpush.msra.mxu0 %v253
        %283 = vmatpush.msra.mxu0 %v251
        %284 = vmatpush.msra.mxu0 %v249
        %285 = vmatmul.f32.gmra.mxu0 %v267
        %v286 = vpop.f32.mrf.mxu0
        %v287 = vadd.f32 0.0, %v286
        %288 = vdwg.mxu0
        %289 = vmatpush.msra.mxu0 0.0
        %290 = vmatpush.msra.mxu0 0.0
        %291 = vmatpush.msra.mxu0 0.0
        %292 = vmatpush.msra.mxu0 0.0
        %293 = vmatpush.msra.mxu0 0.0
        %294 = vmatpush.msra.mxu0 0.0
        %295 = vmatpush.msra.mxu0 0.0
        %296 = vmatpush.msra.mxu0 0.0
        %297 = vmatpush.msra.mxu0 %v264
        %298 = vmatpush.msra.mxu0 %v262
        %299 = vmatpush.msra.mxu0 %v260
        %300 = vmatpush.msra.mxu0 %v258
        %301 = vmatpush.msra.mxu0 %v256
        %302 = vmatpush.msra.mxu0 %v254
        %303 = vmatpush.msra.mxu0 %v252
        %304 = vmatpush.msra.mxu0 %v250
        %305 = vmatmul.f32.gmra.mxu0 %v267
        %v306 = vpop.f32.mrf.mxu0
        %v307 = vadd.f32 0.0, %v306
        %308 = vdwg.mxu0
        %310 = vrot.lane.b32.xlu0 %v287, 64
        %v311 = vpop.permute.xlu0 %310
        %vm312 = vcmask 64512
        %v313 = vsel %vm312, %v287, 0
        %v315 = vsel %vm312, %v311, 0
        %317 = vmatpush.xpose.msra.mxu0 0.0
        %318 = vmatpush.xpose.msra.mxu0 0.0
        %319 = vmatpush.xpose.msra.mxu0 0.0
        %320 = vmatpush.xpose.msra.mxu0 0.0
        %321 = vmatpush.xpose.msra.mxu0 0.0
        %322 = vmatpush.xpose.msra.mxu0 0.0
        %323 = vmatpush.xpose.msra.mxu0 0.0
        %324 = vmatpush.xpose.msra.mxu0 0.0
        %325 = vmatpush.xpose.msra.mxu0 0.0
        %326 = vmatpush.xpose.msra.mxu0 0.0
        %327 = vmatpush.xpose.msra.mxu0 0.0
        %328 = vmatpush.xpose.msra.mxu0 0.0
        %329 = vmatpush.xpose.msra.mxu0 0.0
        %330 = vmatpush.xpose.msra.mxu0 0.0
        %331 = vmatpush.xpose.msra.mxu0 0.0
        %332 = vmatpush.xpose.msra.mxu0 %v315
        %333 = vmatmul.f32.gmra.mxu0 %v313
        %v334 = vpop.f32.mrf.mxu0
        %v335 = vadd.f32 0.0, %v334
        %336 = vdwg.mxu0
        %v337 = vmul.f32 %v335, 0.125
        %v338 = vsel %vm312, %v337, -inf
        %339 = vmax.xlane.f32.xlu0 %v338
        %v340 = vpop.xlane.xlu0 %339
        %v341 = vsub.f32 %v337, %v340
        %v342 = vmul.f32 %v341, 1.442695
        %v343 = vpow.pop %v342
        %v344 = vsel %vm312, %v343, 0.0
        %345 = vadd.xlane.f32.xlu0 %v344
        %v346 = vpop.xlane.xlu0 %345
        %v347 = vrcp.pop %v346
        %v348 = vmul.f32 %v346, %v347
        %v349 = vsub.f32 1.0, %v348
        %v350 = vmul.f32 %v347, %v349
        %v351 = vadd.f32 %v347, %v350
        %vm352 = vweird.f32 %v346
        %vm353 = vweird.f32 %v347
        %vm354 = vmor %vm352, %vm353
        %v355 = vsel %vm354, %v347, %v351
        %v356 = vand.u32 2147483647, %v346
        %vm357 = vcmp.eq.f32.partialorder %v356, 8.507059e+37
        %v358 = vand.u32 %v346, 2147483648
        %v359 = vor.u32 1.1754944e-38, %v358
        %v360 = vsel %vm357, %v359, %v355
        %v361 = vmul.f32 %v343, %v360
        %v363 = vsel %vm312, %v361, 0
        %365 = vmatpush.msra.mxu0 0.0
        %366 = vmatpush.msra.mxu0 0.0
        %367 = vmatpush.msra.mxu0 0.0
        %368 = vmatpush.msra.mxu0 0.0
        %369 = vmatpush.msra.mxu0 0.0
        %370 = vmatpush.msra.mxu0 0.0
        %371 = vmatpush.msra.mxu0 0.0
        %372 = vmatpush.msra.mxu0 0.0
        %373 = vmatpush.msra.mxu0 0.0
        %374 = vmatpush.msra.mxu0 0.0
        %375 = vmatpush.msra.mxu0 0.0
        %376 = vmatpush.msra.mxu0 0.0
        %377 = vmatpush.msra.mxu0 0.0
        %378 = vmatpush.msra.mxu0 0.0
        %379 = vmatpush.msra.mxu0 0.0
        %380 = vmatpush.msra.mxu0 %v307
        %381 = vmatmul.f32.gmra.mxu0 %v363
        %v382 = vpop.f32.mrf.mxu0
        %v383 = vadd.f32 0.0, %v382
        %384 = vdwg.mxu0
        %385 = vrot.lane.b32.xlu0 %v287, 120
        %v386 = vpop.permute.xlu0 %385
        %387 = vrot.lane.b32.xlu0 %v287, 56
        %v388 = vpop.permute.xlu0 %387
        %v389 = vsel %vm312, %v386, 0
        %v391 = vsel %vm312, %v388, 0
        %393 = vmatpush.xpose.msra.mxu0 0.0
        %394 = vmatpush.xpose.msra.mxu0 0.0
        %395 = vmatpush.xpose.msra.mxu0 0.0
        %396 = vmatpush.xpose.msra.mxu0 0.0
        %397 = vmatpush.xpose.msra.mxu0 0.0
        %398 = vmatpush.xpose.msra.mxu0 0.0
        %399 = vmatpush.xpose.msra.mxu0 0.0
        %400 = vmatpush.xpose.msra.mxu0 0.0
        %401 = vmatpush.xpose.msra.mxu0 0.0
        %402 = vmatpush.xpose.msra.mxu0 0.0
        %403 = vmatpush.xpose.msra.mxu0 0.0
        %404 = vmatpush.xpose.msra.mxu0 0.0
        %405 = vmatpush.xpose.msra.mxu0 0.0
        %406 = vmatpush.xpose.msra.mxu0 0.0
        %407 = vmatpush.xpose.msra.mxu0 0.0
        %408 = vmatpush.xpose.msra.mxu0 %v391
        %409 = vmatmul.f32.gmra.mxu0 %v389
        %v410 = vpop.f32.mrf.mxu0
        %v411 = vadd.f32 0.0, %v410
        %412 = vdwg.mxu0
        %v413 = vmul.f32 %v411, 0.125
        %v414 = vsel %vm312, %v413, -inf
        %415 = vmax.xlane.f32.xlu0 %v414
        %v416 = vpop.xlane.xlu0 %415
        %v417 = vsub.f32 %v413, %v416
        %v418 = vmul.f32 %v417, 1.442695
        %v419 = vpow.pop %v418
        %v420 = vsel %vm312, %v419, 0.0
        %421 = vadd.xlane.f32.xlu0 %v420
        %v422 = vpop.xlane.xlu0 %421
        %v423 = vrcp.pop %v422
        %v424 = vmul.f32 %v422, %v423
        %v425 = vsub.f32 1.0, %v424
        %v426 = vmul.f32 %v423, %v425
        %v427 = vadd.f32 %v423, %v426
        %vm428 = vweird.f32 %v422
        %vm429 = vweird.f32 %v423
        %vm430 = vmor %vm428, %vm429
        %v431 = vsel %vm430, %v423, %v427
        %v432 = vand.u32 2147483647, %v422
        %vm433 = vcmp.eq.f32.partialorder %v432, 8.507059e+37
        %v434 = vand.u32 %v422, 2147483648
        %v435 = vor.u32 1.1754944e-38, %v434
        %v436 = vsel %vm433, %v435, %v431
        %v437 = vmul.f32 %v419, %v436
        %439 = vrot.lane.b32.xlu0 %v307, 120
        %v440 = vpop.permute.xlu0 %439
        %v443 = vsel %vm312, %v437, 0
        %445 = vmatpush.msra.mxu0 0.0
        %446 = vmatpush.msra.mxu0 0.0
        %447 = vmatpush.msra.mxu0 0.0
        %448 = vmatpush.msra.mxu0 0.0
        %449 = vmatpush.msra.mxu0 0.0
        %450 = vmatpush.msra.mxu0 0.0
        %451 = vmatpush.msra.mxu0 0.0
        %452 = vmatpush.msra.mxu0 0.0
        %453 = vmatpush.msra.mxu0 0.0
        %454 = vmatpush.msra.mxu0 0.0
        %455 = vmatpush.msra.mxu0 0.0
        %456 = vmatpush.msra.mxu0 0.0
        %457 = vmatpush.msra.mxu0 0.0
        %458 = vmatpush.msra.mxu0 0.0
        %459 = vmatpush.msra.mxu0 0.0
        %460 = vmatpush.msra.mxu0 %v440
        %461 = vmatmul.f32.gmra.mxu0 %v443
        %v462 = vpop.f32.mrf.mxu0
        %v463 = vadd.f32 0.0, %v462
        %464 = vdwg.mxu0
        %465 = vrot.lane.b32.xlu0 %v287, 112
        %v466 = vpop.permute.xlu0 %465
        %467 = vrot.lane.b32.xlu0 %v287, 48
        %v468 = vpop.permute.xlu0 %467
        %v469 = vsel %vm312, %v466, 0
        %v471 = vsel %vm312, %v468, 0
        %473 = vmatpush.xpose.msra.mxu0 0.0
        %474 = vmatpush.xpose.msra.mxu0 0.0
        %475 = vmatpush.xpose.msra.mxu0 0.0
        %476 = vmatpush.xpose.msra.mxu0 0.0
        %477 = vmatpush.xpose.msra.mxu0 0.0
        %478 = vmatpush.xpose.msra.mxu0 0.0
        %479 = vmatpush.xpose.msra.mxu0 0.0
        %480 = vmatpush.xpose.msra.mxu0 0.0
        %481 = vmatpush.xpose.msra.mxu0 0.0
        %482 = vmatpush.xpose.msra.mxu0 0.0
        %483 = vmatpush.xpose.msra.mxu0 0.0
        %484 = vmatpush.xpose.msra.mxu0 0.0
        %485 = vmatpush.xpose.msra.mxu0 0.0
        %486 = vmatpush.xpose.msra.mxu0 0.0
        %487 = vmatpush.xpose.msra.mxu0 0.0
        %488 = vmatpush.xpose.msra.mxu0 %v471
        %489 = vmatmul.f32.gmra.mxu0 %v469
        %v490 = vpop.f32.mrf.mxu0
        %v491 = vadd.f32 0.0, %v490
        %492 = vdwg.mxu0
        %v493 = vmul.f32 %v491, 0.125
        %v494 = vsel %vm312, %v493, -inf
        %495 = vmax.xlane.f32.xlu0 %v494
        %v496 = vpop.xlane.xlu0 %495
        %v497 = vsub.f32 %v493, %v496
        %v498 = vmul.f32 %v497, 1.442695
        %v499 = vpow.pop %v498
        %v500 = vsel %vm312, %v499, 0.0
        %501 = vadd.xlane.f32.xlu0 %v500
        %v502 = vpop.xlane.xlu0 %501
        %v503 = vrcp.pop %v502
        %v504 = vmul.f32 %v502, %v503
        %v505 = vsub.f32 1.0, %v504
        %v506 = vmul.f32 %v503, %v505
        %v507 = vadd.f32 %v503, %v506
        %vm508 = vweird.f32 %v502
        %vm509 = vweird.f32 %v503
        %vm510 = vmor %vm508, %vm509
        %v511 = vsel %vm510, %v503, %v507
        %v512 = vand.u32 2147483647, %v502
        %vm513 = vcmp.eq.f32.partialorder %v512, 8.507059e+37
        %v514 = vand.u32 %v502, 2147483648
        %v515 = vor.u32 1.1754944e-38, %v514
        %v516 = vsel %vm513, %v515, %v511
        %v517 = vmul.f32 %v499, %v516
        %518 = vrot.lane.b32.xlu0 %v307, 112
        %v519 = vpop.permute.xlu0 %518
        %v522 = vsel %vm312, %v517, 0
        %524 = vmatpush.msra.mxu0 0.0
        %525 = vmatpush.msra.mxu0 0.0
        %526 = vmatpush.msra.mxu0 0.0
        %527 = vmatpush.msra.mxu0 0.0
        %528 = vmatpush.msra.mxu0 0.0
        %529 = vmatpush.msra.mxu0 0.0
        %530 = vmatpush.msra.mxu0 0.0
        %531 = vmatpush.msra.mxu0 0.0
        %532 = vmatpush.msra.mxu0 0.0
        %533 = vmatpush.msra.mxu0 0.0
        %534 = vmatpush.msra.mxu0 0.0
        %535 = vmatpush.msra.mxu0 0.0
        %536 = vmatpush.msra.mxu0 0.0
        %537 = vmatpush.msra.mxu0 0.0
        %538 = vmatpush.msra.mxu0 0.0
        %539 = vmatpush.msra.mxu0 %v519
        %540 = vmatmul.f32.gmra.mxu0 %v522
        %v541 = vpop.f32.mrf.mxu0
        %v542 = vadd.f32 0.0, %v541
        %543 = vdwg.mxu0
        %544 = vrot.lane.b32.xlu0 %v287, 104
        %v545 = vpop.permute.xlu0 %544
        %546 = vrot.lane.b32.xlu0 %v287, 40
        %v547 = vpop.permute.xlu0 %546
        %v548 = vsel %vm312, %v545, 0
        %v550 = vsel %vm312, %v547, 0
        %552 = vmatpush.xpose.msra.mxu0 0.0
        %553 = vmatpush.xpose.msra.mxu0 0.0
        %554 = vmatpush.xpose.msra.mxu0 0.0
        %555 = vmatpush.xpose.msra.mxu0 0.0
        %556 = vmatpush.xpose.msra.mxu0 0.0
        %557 = vmatpush.xpose.msra.mxu0 0.0
        %558 = vmatpush.xpose.msra.mxu0 0.0
        %559 = vmatpush.xpose.msra.mxu0 0.0
        %560 = vmatpush.xpose.msra.mxu0 0.0
        %561 = vmatpush.xpose.msra.mxu0 0.0
        %562 = vmatpush.xpose.msra.mxu0 0.0
        %563 = vmatpush.xpose.msra.mxu0 0.0
        %564 = vmatpush.xpose.msra.mxu0 0.0
        %565 = vmatpush.xpose.msra.mxu0 0.0
        %566 = vmatpush.xpose.msra.mxu0 0.0
        %567 = vmatpush.xpose.msra.mxu0 %v550
        %568 = vmatmul.f32.gmra.mxu0 %v548
        %v569 = vpop.f32.mrf.mxu0
        %v570 = vadd.f32 0.0, %v569
        %571 = vdwg.mxu0
        %v572 = vmul.f32 %v570, 0.125
        %v573 = vsel %vm312, %v572, -inf
        %574 = vmax.xlane.f32.xlu0 %v573
        %v575 = vpop.xlane.xlu0 %574
        %v576 = vsub.f32 %v572, %v575
        %v577 = vmul.f32 %v576, 1.442695
        %v578 = vpow.pop %v577
        %v579 = vsel %vm312, %v578, 0.0
        %580 = vadd.xlane.f32.xlu0 %v579
        %v581 = vpop.xlane.xlu0 %580
        %v582 = vrcp.pop %v581
        %v583 = vmul.f32 %v581, %v582
        %v584 = vsub.f32 1.0, %v583
        %v585 = vmul.f32 %v582, %v584
        %v586 = vadd.f32 %v582, %v585
        %vm587 = vweird.f32 %v581
        %vm588 = vweird.f32 %v582
        %vm589 = vmor %vm587, %vm588
        %v590 = vsel %vm589, %v582, %v586
        %v591 = vand.u32 2147483647, %v581
        %vm592 = vcmp.eq.f32.partialorder %v591, 8.507059e+37
        %v593 = vand.u32 %v581, 2147483648
        %v594 = vor.u32 1.1754944e-38, %v593
        %v595 = vsel %vm592, %v594, %v590
        %v596 = vmul.f32 %v578, %v595
        %597 = vrot.lane.b32.xlu0 %v307, 104
        %v598 = vpop.permute.xlu0 %597
        %v601 = vsel %vm312, %v596, 0
        %603 = vmatpush.msra.mxu0 0.0
        %604 = vmatpush.msra.mxu0 0.0
        %605 = vmatpush.msra.mxu0 0.0
        %606 = vmatpush.msra.mxu0 0.0
        %607 = vmatpush.msra.mxu0 0.0
        %608 = vmatpush.msra.mxu0 0.0
        %609 = vmatpush.msra.mxu0 0.0
        %610 = vmatpush.msra.mxu0 0.0
        %611 = vmatpush.msra.mxu0 0.0
        %612 = vmatpush.msra.mxu0 0.0
        %613 = vmatpush.msra.mxu0 0.0
        %614 = vmatpush.msra.mxu0 0.0
        %615 = vmatpush.msra.mxu0 0.0
        %616 = vmatpush.msra.mxu0 0.0
        %617 = vmatpush.msra.mxu0 0.0
        %618 = vmatpush.msra.mxu0 %v598
        %619 = vmatmul.f32.gmra.mxu0 %v601
        %v620 = vpop.f32.mrf.mxu0
        %v621 = vadd.f32 0.0, %v620
        %622 = vdwg.mxu0
        %623 = vrot.lane.b32.xlu0 %v287, 96
        %v624 = vpop.permute.xlu0 %623
        %625 = vrot.lane.b32.xlu0 %v287, 32
        %v626 = vpop.permute.xlu0 %625
        %v627 = vsel %vm312, %v624, 0
        %v629 = vsel %vm312, %v626, 0
        %631 = vmatpush.xpose.msra.mxu0 0.0
        %632 = vmatpush.xpose.msra.mxu0 0.0
        %633 = vmatpush.xpose.msra.mxu0 0.0
        %634 = vmatpush.xpose.msra.mxu0 0.0
        %635 = vmatpush.xpose.msra.mxu0 0.0
        %636 = vmatpush.xpose.msra.mxu0 0.0
        %637 = vmatpush.xpose.msra.mxu0 0.0
        %638 = vmatpush.xpose.msra.mxu0 0.0
        %639 = vmatpush.xpose.msra.mxu0 0.0
        %640 = vmatpush.xpose.msra.mxu0 0.0
        %641 = vmatpush.xpose.msra.mxu0 0.0
        %642 = vmatpush.xpose.msra.mxu0 0.0
        %643 = vmatpush.xpose.msra.mxu0 0.0
        %644 = vmatpush.xpose.msra.mxu0 0.0
        %645 = vmatpush.xpose.msra.mxu0 0.0
        %646 = vmatpush.xpose.msra.mxu0 %v629
        %647 = vmatmul.f32.gmra.mxu0 %v627
        %v648 = vpop.f32.mrf.mxu0
        %v649 = vadd.f32 0.0, %v648
        %650 = vdwg.mxu0
        %v651 = vmul.f32 %v649, 0.125
        %v652 = vsel %vm312, %v651, -inf
        %653 = vmax.xlane.f32.xlu0 %v652
        %v654 = vpop.xlane.xlu0 %653
        %v655 = vsub.f32 %v651, %v654
        %v656 = vmul.f32 %v655, 1.442695
        %v657 = vpow.pop %v656
        %v658 = vsel %vm312, %v657, 0.0
        %659 = vadd.xlane.f32.xlu0 %v658
        %v660 = vpop.xlane.xlu0 %659
        %v661 = vrcp.pop %v660
        %v662 = vmul.f32 %v660, %v661
        %v663 = vsub.f32 1.0, %v662
        %v664 = vmul.f32 %v661, %v663
        %v665 = vadd.f32 %v661, %v664
        %vm666 = vweird.f32 %v660
        %vm667 = vweird.f32 %v661
        %vm668 = vmor %vm666, %vm667
        %v669 = vsel %vm668, %v661, %v665
        %v670 = vand.u32 2147483647, %v660
        %vm671 = vcmp.eq.f32.partialorder %v670, 8.507059e+37
        %v672 = vand.u32 %v660, 2147483648
        %v673 = vor.u32 1.1754944e-38, %v672
        %v674 = vsel %vm671, %v673, %v669
        %v675 = vmul.f32 %v657, %v674
        %676 = vrot.lane.b32.xlu0 %v307, 96
        %v677 = vpop.permute.xlu0 %676
        %v680 = vsel %vm312, %v675, 0
        %682 = vmatpush.msra.mxu0 0.0
        %683 = vmatpush.msra.mxu0 0.0
        %684 = vmatpush.msra.mxu0 0.0
        %685 = vmatpush.msra.mxu0 0.0
        %686 = vmatpush.msra.mxu0 0.0
        %687 = vmatpush.msra.mxu0 0.0
        %688 = vmatpush.msra.mxu0 0.0
        %689 = vmatpush.msra.mxu0 0.0
        %690 = vmatpush.msra.mxu0 0.0
        %691 = vmatpush.msra.mxu0 0.0
        %692 = vmatpush.msra.mxu0 0.0
        %693 = vmatpush.msra.mxu0 0.0
        %694 = vmatpush.msra.mxu0 0.0
        %695 = vmatpush.msra.mxu0 0.0
        %696 = vmatpush.msra.mxu0 0.0
        %697 = vmatpush.msra.mxu0 %v677
        %698 = vmatmul.f32.gmra.mxu0 %v680
        %v699 = vpop.f32.mrf.mxu0
        %v700 = vadd.f32 0.0, %v699
        %701 = vdwg.mxu0
        %702 = vrot.lane.b32.xlu0 %v287, 88
        %v703 = vpop.permute.xlu0 %702
        %704 = vrot.lane.b32.xlu0 %v287, 24
        %v705 = vpop.permute.xlu0 %704
        %v706 = vsel %vm312, %v703, 0
        %v708 = vsel %vm312, %v705, 0
        %710 = vmatpush.xpose.msra.mxu0 0.0
        %711 = vmatpush.xpose.msra.mxu0 0.0
        %712 = vmatpush.xpose.msra.mxu0 0.0
        %713 = vmatpush.xpose.msra.mxu0 0.0
        %714 = vmatpush.xpose.msra.mxu0 0.0
        %715 = vmatpush.xpose.msra.mxu0 0.0
        %716 = vmatpush.xpose.msra.mxu0 0.0
        %717 = vmatpush.xpose.msra.mxu0 0.0
        %718 = vmatpush.xpose.msra.mxu0 0.0
        %719 = vmatpush.xpose.msra.mxu0 0.0
        %720 = vmatpush.xpose.msra.mxu0 0.0
        %721 = vmatpush.xpose.msra.mxu0 0.0
        %722 = vmatpush.xpose.msra.mxu0 0.0
        %723 = vmatpush.xpose.msra.mxu0 0.0
        %724 = vmatpush.xpose.msra.mxu0 0.0
        %725 = vmatpush.xpose.msra.mxu0 %v708
        %726 = vmatmul.f32.gmra.mxu0 %v706
        %v727 = vpop.f32.mrf.mxu0
        %v728 = vadd.f32 0.0, %v727
        %729 = vdwg.mxu0
        %v730 = vmul.f32 %v728, 0.125
        %v731 = vsel %vm312, %v730, -inf
        %732 = vmax.xlane.f32.xlu0 %v731
        %v733 = vpop.xlane.xlu0 %732
        %v734 = vsub.f32 %v730, %v733
        %v735 = vmul.f32 %v734, 1.442695
        %v736 = vpow.pop %v735
        %v737 = vsel %vm312, %v736, 0.0
        %738 = vadd.xlane.f32.xlu0 %v737
        %v739 = vpop.xlane.xlu0 %738
        %v740 = vrcp.pop %v739
        %v741 = vmul.f32 %v739, %v740
        %v742 = vsub.f32 1.0, %v741
        %v743 = vmul.f32 %v740, %v742
        %v744 = vadd.f32 %v740, %v743
        %vm745 = vweird.f32 %v739
        %vm746 = vweird.f32 %v740
        %vm747 = vmor %vm745, %vm746
        %v748 = vsel %vm747, %v740, %v744
        %v749 = vand.u32 2147483647, %v739
        %vm750 = vcmp.eq.f32.partialorder %v749, 8.507059e+37
        %v751 = vand.u32 %v739, 2147483648
        %v752 = vor.u32 1.1754944e-38, %v751
        %v753 = vsel %vm750, %v752, %v748
        %v754 = vmul.f32 %v736, %v753
        %755 = vrot.lane.b32.xlu0 %v307, 88
        %v756 = vpop.permute.xlu0 %755
        %v759 = vsel %vm312, %v754, 0
        %761 = vmatpush.msra.mxu0 0.0
        %762 = vmatpush.msra.mxu0 0.0
        %763 = vmatpush.msra.mxu0 0.0
        %764 = vmatpush.msra.mxu0 0.0
        %765 = vmatpush.msra.mxu0 0.0
        %766 = vmatpush.msra.mxu0 0.0
        %767 = vmatpush.msra.mxu0 0.0
        %768 = vmatpush.msra.mxu0 0.0
        %769 = vmatpush.msra.mxu0 0.0
        %770 = vmatpush.msra.mxu0 0.0
        %771 = vmatpush.msra.mxu0 0.0
        %772 = vmatpush.msra.mxu0 0.0
        %773 = vmatpush.msra.mxu0 0.0
        %774 = vmatpush.msra.mxu0 0.0
        %775 = vmatpush.msra.mxu0 0.0
        %776 = vmatpush.msra.mxu0 %v756
        %777 = vmatmul.f32.gmra.mxu0 %v759
        %v778 = vpop.f32.mrf.mxu0
        %v779 = vadd.f32 0.0, %v778
        %780 = vdwg.mxu0
        %781 = vrot.lane.b32.xlu0 %v287, 80
        %v782 = vpop.permute.xlu0 %781
        %783 = vrot.lane.b32.xlu0 %v287, 16
        %v784 = vpop.permute.xlu0 %783
        %v785 = vsel %vm312, %v782, 0
        %v787 = vsel %vm312, %v784, 0
        %789 = vmatpush.xpose.msra.mxu0 0.0
        %790 = vmatpush.xpose.msra.mxu0 0.0
        %791 = vmatpush.xpose.msra.mxu0 0.0
        %792 = vmatpush.xpose.msra.mxu0 0.0
        %793 = vmatpush.xpose.msra.mxu0 0.0
        %794 = vmatpush.xpose.msra.mxu0 0.0
        %795 = vmatpush.xpose.msra.mxu0 0.0
        %796 = vmatpush.xpose.msra.mxu0 0.0
        %797 = vmatpush.xpose.msra.mxu0 0.0
        %798 = vmatpush.xpose.msra.mxu0 0.0
        %799 = vmatpush.xpose.msra.mxu0 0.0
        %800 = vmatpush.xpose.msra.mxu0 0.0
        %801 = vmatpush.xpose.msra.mxu0 0.0
        %802 = vmatpush.xpose.msra.mxu0 0.0
        %803 = vmatpush.xpose.msra.mxu0 0.0
        %804 = vmatpush.xpose.msra.mxu0 %v787
        %805 = vmatmul.f32.gmra.mxu0 %v785
        %v806 = vpop.f32.mrf.mxu0
        %v807 = vadd.f32 0.0, %v806
        %808 = vdwg.mxu0
        %v809 = vmul.f32 %v807, 0.125
        %v810 = vsel %vm312, %v809, -inf
        %811 = vmax.xlane.f32.xlu0 %v810
        %v812 = vpop.xlane.xlu0 %811
        %v813 = vsub.f32 %v809, %v812
        %v814 = vmul.f32 %v813, 1.442695
        %v815 = vpow.pop %v814
        %v816 = vsel %vm312, %v815, 0.0
        %817 = vadd.xlane.f32.xlu0 %v816
        %v818 = vpop.xlane.xlu0 %817
        %v819 = vrcp.pop %v818
        %v820 = vmul.f32 %v818, %v819
        %v821 = vsub.f32 1.0, %v820
        %v822 = vmul.f32 %v819, %v821
        %v823 = vadd.f32 %v819, %v822
        %vm824 = vweird.f32 %v818
        %vm825 = vweird.f32 %v819
        %vm826 = vmor %vm824, %vm825
        %v827 = vsel %vm826, %v819, %v823
        %v828 = vand.u32 2147483647, %v818
        %vm829 = vcmp.eq.f32.partialorder %v828, 8.507059e+37
        %v830 = vand.u32 %v818, 2147483648
        %v831 = vor.u32 1.1754944e-38, %v830
        %v832 = vsel %vm829, %v831, %v827
        %v833 = vmul.f32 %v815, %v832
        %834 = vrot.lane.b32.xlu0 %v307, 80
        %v835 = vpop.permute.xlu0 %834
        %v838 = vsel %vm312, %v833, 0
        %840 = vmatpush.msra.mxu0 0.0
        %841 = vmatpush.msra.mxu0 0.0
        %842 = vmatpush.msra.mxu0 0.0
        %843 = vmatpush.msra.mxu0 0.0
        %844 = vmatpush.msra.mxu0 0.0
        %845 = vmatpush.msra.mxu0 0.0
        %846 = vmatpush.msra.mxu0 0.0
        %847 = vmatpush.msra.mxu0 0.0
        %848 = vmatpush.msra.mxu0 0.0
        %849 = vmatpush.msra.mxu0 0.0
        %850 = vmatpush.msra.mxu0 0.0
        %851 = vmatpush.msra.mxu0 0.0
        %852 = vmatpush.msra.mxu0 0.0
        %853 = vmatpush.msra.mxu0 0.0
        %854 = vmatpush.msra.mxu0 0.0
        %855 = vmatpush.msra.mxu0 %v835
        %856 = vmatmul.f32.gmra.mxu0 %v838
        %v857 = vpop.f32.mrf.mxu0
        %v858 = vadd.f32 0.0, %v857
        %859 = vdwg.mxu0
        %860 = vrot.lane.b32.xlu0 %v287, 72
        %v861 = vpop.permute.xlu0 %860
        %862 = vrot.lane.b32.xlu0 %v287, 8
        %v863 = vpop.permute.xlu0 %862
        %v864 = vsel %vm312, %v861, 0
        %v866 = vsel %vm312, %v863, 0
        %868 = vmatpush.xpose.msra.mxu0 0.0
        %869 = vmatpush.xpose.msra.mxu0 0.0
        %870 = vmatpush.xpose.msra.mxu0 0.0
        %871 = vmatpush.xpose.msra.mxu0 0.0
        %872 = vmatpush.xpose.msra.mxu0 0.0
        %873 = vmatpush.xpose.msra.mxu0 0.0
        %874 = vmatpush.xpose.msra.mxu0 0.0
        %875 = vmatpush.xpose.msra.mxu0 0.0
        %876 = vmatpush.xpose.msra.mxu0 0.0
        %877 = vmatpush.xpose.msra.mxu0 0.0
        %878 = vmatpush.xpose.msra.mxu0 0.0
        %879 = vmatpush.xpose.msra.mxu0 0.0
        %880 = vmatpush.xpose.msra.mxu0 0.0
        %881 = vmatpush.xpose.msra.mxu0 0.0
        %882 = vmatpush.xpose.msra.mxu0 0.0
        %883 = vmatpush.xpose.msra.mxu0 %v866
        %884 = vmatmul.f32.gmra.mxu0 %v864
        %v885 = vpop.f32.mrf.mxu0
        %v886 = vadd.f32 0.0, %v885
        %887 = vdwg.mxu0
        %v888 = vmul.f32 %v886, 0.125
        %v889 = vsel %vm312, %v888, -inf
        %890 = vmax.xlane.f32.xlu0 %v889
        %v891 = vpop.xlane.xlu0 %890
        %v892 = vsub.f32 %v888, %v891
        %v893 = vmul.f32 %v892, 1.442695
        %v894 = vpow.pop %v893
        %v895 = vsel %vm312, %v894, 0.0
        %896 = vadd.xlane.f32.xlu0 %v895
        %v897 = vpop.xlane.xlu0 %896
        %v898 = vrcp.pop %v897
        %v899 = vmul.f32 %v897, %v898
        %v900 = vsub.f32 1.0, %v899
        %v901 = vmul.f32 %v898, %v900
        %v902 = vadd.f32 %v898, %v901
        %vm903 = vweird.f32 %v897
        %vm904 = vweird.f32 %v898
        %vm905 = vmor %vm903, %vm904
        %v906 = vsel %vm905, %v898, %v902
        %v907 = vand.u32 2147483647, %v897
        %vm908 = vcmp.eq.f32.partialorder %v907, 8.507059e+37
        %v909 = vand.u32 %v897, 2147483648
        %v910 = vor.u32 1.1754944e-38, %v909
        %v911 = vsel %vm908, %v910, %v906
        %v912 = vmul.f32 %v894, %v911
        %913 = vrot.lane.b32.xlu0 %v307, 72
        %v914 = vpop.permute.xlu0 %913
        %v917 = vsel %vm312, %v912, 0
        %919 = vmatpush.msra.mxu0 0.0
        %920 = vmatpush.msra.mxu0 0.0
        %921 = vmatpush.msra.mxu0 0.0
        %922 = vmatpush.msra.mxu0 0.0
        %923 = vmatpush.msra.mxu0 0.0
        %924 = vmatpush.msra.mxu0 0.0
        %925 = vmatpush.msra.mxu0 0.0
        %926 = vmatpush.msra.mxu0 0.0
        %927 = vmatpush.msra.mxu0 0.0
        %928 = vmatpush.msra.mxu0 0.0
        %929 = vmatpush.msra.mxu0 0.0
        %930 = vmatpush.msra.mxu0 0.0
        %931 = vmatpush.msra.mxu0 0.0
        %932 = vmatpush.msra.mxu0 0.0
        %933 = vmatpush.msra.mxu0 0.0
        %934 = vmatpush.msra.mxu0 %v914
        %935 = vmatmul.f32.gmra.mxu0 %v917
        %v936 = vpop.f32.mrf.mxu0
        %v937 = vadd.f32 0.0, %v936
        %938 = vdwg.mxu0
        %940 = vrot.lane.b32.xlu0 %v463, 8
        %v941 = vpop.permute.xlu0 %940
        %944 = vrot.lane.b32.xlu0 %v542, 16
        %v945 = vpop.permute.xlu0 %944
        %948 = vrot.lane.b32.xlu0 %v621, 24
        %v949 = vpop.permute.xlu0 %948
        %952 = vrot.lane.b32.xlu0 %v700, 32
        %v953 = vpop.permute.xlu0 %952
        %956 = vrot.lane.b32.xlu0 %v779, 40
        %v957 = vpop.permute.xlu0 %956
        %960 = vrot.lane.b32.xlu0 %v858, 48
        %v961 = vpop.permute.xlu0 %960
        %964 = vrot.lane.b32.xlu0 %v937, 56
        %v965 = vpop.permute.xlu0 %964
        %v967 = vsel %vm312, %v383, %v941
        %vm968 = vcmask 130048
        %v969 = vsel %vm968, %v967, %v945
        %vm970 = vcmask 195584
        %v971 = vsel %vm970, %v969, %v949
        %vm972 = vcmask 261120
        %v973 = vsel %vm972, %v971, %v953
        %vm974 = vcmask 326656
        %v975 = vsel %vm974, %v973, %v957
        %vm976 = vcmask 392192
        %v977 = vsel %vm976, %v975, %v961
        %vm978 = vcmask 457728
        %v979 = vsel %vm978, %v977, %v965
        %v980 = vld [vmem:[#allocation7] sm:$0xff]
        %v981 = vld [vmem:[#allocation7 + $0x8] sm:$0xff]
        %v982 = vld [vmem:[#allocation7 + $0x10] sm:$0xff]
        %v983 = vld [vmem:[#allocation7 + $0x18] sm:$0xff]
        %v984 = vld [vmem:[#allocation7 + $0x20] sm:$0xff]
        %v985 = vld [vmem:[#allocation7 + $0x28] sm:$0xff]
        %v986 = vld [vmem:[#allocation7 + $0x30] sm:$0xff]
        %v987 = vld [vmem:[#allocation7 + $0x38] sm:$0xff]
        %v988 = vld [vmem:[%s3] sm:$0x1]
        %v990 = vperm.slane %v988, 0
        %v993 = vsel %vm265, %v979, 0
        %995 = vmatpush.msra.mxu0 0.0
        %996 = vmatpush.msra.mxu0 0.0
        %997 = vmatpush.msra.mxu0 0.0
        %998 = vmatpush.msra.mxu0 0.0
        %999 = vmatpush.msra.mxu0 0.0
        %1000 = vmatpush.msra.mxu0 0.0
        %1001 = vmatpush.msra.mxu0 0.0
        %1002 = vmatpush.msra.mxu0 0.0
        %1003 = vmatpush.msra.mxu0 %v987
        %1004 = vmatpush.msra.mxu0 %v986
        %1005 = vmatpush.msra.mxu0 %v985
        %1006 = vmatpush.msra.mxu0 %v984
        %1007 = vmatpush.msra.mxu0 %v983
        %1008 = vmatpush.msra.mxu0 %v982
        %1009 = vmatpush.msra.mxu0 %v981
        %1010 = vmatpush.msra.mxu0 %v980
        %1011 = vmatmul.f32.gmra.mxu0 %v993
        %v1012 = vpop.f32.mrf.mxu0
        %v1013 = vadd.f32 %v990, %v1012
        %1014 = vdwg.mxu0
        %1015 = vst.msk [vmem:[%s247] sm:$0xff] %vm265, %v1013
        %s1016 = sand.u32 %s119, 1
        %s1017 = scalar_lea.sflag [#allocation4], %s1016
        %s1018 = sand.u32 %s119, 1
        %s1019 = smul.addr %s1018, 8
        %s1020 = scalar_lea.vmem [#allocation8], %s1019
        // Predicated region
        $region49: #{tpu_custom_call.1} parent=35 // pred_check
          %p1021 = pneg %p129
        $region50: #{tpu_custom_call.1} parent=35 // pred_check_branch
          %1023 = sbr.rel (%p1021) target = $region52
        $region51: #{tpu_custom_call.1} parent=35 // pred_region
          %1025 = vsyncadd %s1017, 0
          %s1026 = smul.addr %s22, 8
          %s1027 = scalar_lea.hbm %s4, %s1026
          %s1029 = sshll.u32 %s1020, 4
          %s1030 = int_to_ptr.vmem [resolvable:$true] %s1029
          %s1031 = sshll.u32 %s1027, 4
          %s1032 = int_to_ptr.hbm [resolvable:$true] %s1031
          %1034 = dma.vmem_to_hbm [thread:$0]  %s1030, 128, %s1032, %s1017
        $region52: #{tpu_custom_call.1} parent=35 // pred_fallthru
          _
      $region36: #{tpu_custom_call.1} parent=5 // pred_fallthru
        _
      %p1035 = scmp.le.s32.totalorder 2, %s17
      // Predicated region
      $region53: #{tpu_custom_call.1} parent=5 // pred_check
        %p1036 = pneg %p1035
      $region54: #{tpu_custom_call.1} parent=5 // pred_check_branch
        %1038 = sbr.rel (%p1036) target = $region56
      $region55: #{tpu_custom_call.1} parent=5 // pred_region
        %s1039 = ssub.s32 %s17, 2
        // Predicated region
        $region57: #{tpu_custom_call.1} parent=55 // pred_check
          %p1040 = pneg %p135
        $region58: #{tpu_custom_call.1} parent=55 // pred_check_branch
          %1042 = sbr.rel (%p1040) target = $region60
        $region59: #{tpu_custom_call.1} parent=55 // pred_region
          %s1043 = sand.u32 %s120, 1
          %s1044 = scalar_lea.sflag [#allocation4], %s1043
          %s1045 = sand.u32 %s120, 1
          %s1046 = smul.addr %s1045, 8
          %s1047 = scalar_lea.vmem [#allocation8], %s1046
          %1049 = dma.done %s1044, 128
        $region60: #{tpu_custom_call.1} parent=55 // pred_fallthru
          _
      $region56: #{tpu_custom_call.1} parent=5 // pred_fallthru
        _
    $region6: #{tpu_custom_call.1} parent=1 // loop_footer
      %s21 = sadd.s32 1, %s17
    $region7: #{tpu_custom_call.1} parent=1 // loop_footer_branch
      %16 = sbr.rel target = $region3
    $region8: #{tpu_custom_call.1} parent=1 // loop_exit
      _
    %1050 = vsyncpa [#allocation3], 1
    %s1051 = scalar_lea.sflag [#allocation3], 1
    %1052 = vsyncpa %s1051, 1
    %1053 = vsyncpa [#allocation6], 1
    %1054 = vsyncpa [#allocation4], 1
    %s1055 = scalar_lea.sflag [#allocation4], 1
    %1056 = vsyncpa %s1055, 1

</llo_original>
